<compile_context>
chip_gen: v7x
topology: tpu7x:2x2x1
jax: 0.10.0
libtpu: 0.0.40
codegen_flags: <defaults>
</compile_context>

<pallas_src>
import functools

import jax
import jax.numpy as jnp
from jax import lax
from jax.experimental import pallas as pl
from jax.experimental.pallas import tpu as pltpu

EPS = 1e-5


def _pick_tile_f(batch, size):
    """Feature tile (lanes per input segment).  Lane-dense (mult. of 128) when
    possible, sized so the per-step working set stays well under the scoped
    VMEM limit on all generations (incl. v7x's 64 MiB physical VMEM)."""
    if size % 128 == 0:
        budget = 8 * 1024 * 1024  # ~bytes per pipeline step (pre double-buffer)
        for tf in (512, 256, 128):
            if size % tf == 0 and 40 * batch * tf <= budget:
                return tf
        return 128
    # Odd sizes: take the full feature extent in one block (single grid step).
    return size


def _feature_kernel(*refs, inv_b, keep_threshold, apply_dropout):
    """refs = (prem, hypo, gamma, beta[, bits], out)

    prem, hypo : VMEM (B, TF)          input feature tiles
    gamma,beta : VMEM (4, TF)          BN affine params, keep_scale pre-folded
    bits       : VMEM (B, 4, TF) u32   dropout random bits (only if dropout on)
    out        : VMEM (B, 4, TF)       concatenated-segment output slab
    """
    out_ref = refs[-1]
    prem_ref, hypo_ref, gamma_ref, beta_ref = refs[:4]
    bits_ref = refs[4] if apply_dropout else None

    prem = prem_ref[...].astype(jnp.float32)
    hypo = hypo_ref[...].astype(jnp.float32)

    # Build the concatenated slab once: segments stack along the sublane axis.
    x = jnp.stack([prem, hypo, prem - hypo, prem * hypo], axis=1)  # (B, 4, TF)

    # One-pass training-mode BatchNorm1d stats (biased variance) over the batch.
    s1 = jnp.sum(x, axis=0, keepdims=True)
    s2 = jnp.sum(x * x, axis=0, keepdims=True)
    mean = s1 * inv_b
    var = s2 * inv_b - mean * mean
    xhat = (x - mean) * lax.rsqrt(var + EPS)

    # gamma/beta already carry the 1/(1-p) inverted-dropout scale.
    y = xhat * gamma_ref[...][None, :, :] + beta_ref[...][None, :, :]

    if apply_dropout:
        keep = bits_ref[...] >= jnp.uint32(keep_threshold)
        y = jnp.where(keep, y, jnp.float32(0.0))

    out_ref[...] = y.astype(out_ref.dtype)  # single slab store per grid step


def make_dropout_bits(rng_key, batch, size):
    return jax.random.bits(rng_key, (batch, 4, size), dtype=jnp.uint32)


def feature_forward(prem, hypo, gamma, beta, *, dropout_p, rng_key=None):
    """prem, hypo: (B, size) f32; gamma, beta: (4*size,) f32 -> (B, 4*size) f32."""
    b, size = prem.shape
    assert hypo.shape == (b, size)
    assert gamma.shape == (4 * size,) and beta.shape == (4 * size,)

    p = float(dropout_p)
    if p >= 1.0:
        # Dropout with p=1 zeroes everything (torch training-mode behavior).
        return jnp.zeros((b, 4 * size), jnp.float32)
    apply_dropout = p > 0.0
    keep_scale = 1.0 / (1.0 - p) if apply_dropout else 1.0

    # Fold the inverted-dropout scale into the BN affine params on the host.
    gamma4 = (gamma.astype(jnp.float32) * keep_scale).reshape(4, size)
    beta4 = (beta.astype(jnp.float32) * keep_scale).reshape(4, size)

    tf = _pick_tile_f(b, size)
    grid = (size // tf,)

    in_specs = [
        pl.BlockSpec((b, tf), lambda j: (0, j)),       # prem
        pl.BlockSpec((b, tf), lambda j: (0, j)),       # hypo
        pl.BlockSpec((4, tf), lambda j: (0, j)),       # gamma (scaled)
        pl.BlockSpec((4, tf), lambda j: (0, j)),       # beta  (scaled)
    ]
    operands = [prem, hypo, gamma4, beta4]

    keep_threshold = 0
    if apply_dropout:
        assert rng_key is not None, "rng_key required when dropout_p > 0"
        bits = make_dropout_bits(rng_key, b, size)
        in_specs.append(pl.BlockSpec((b, 4, tf), lambda j: (0, 0, j)))
        operands.append(bits)
        # keep iff bits >= p * 2^32  => P(keep) = 1 - p (up to 2^-32 quantization)
        keep_threshold = min(int(round(p * float(2 ** 32))), 2 ** 32 - 1)

    kernel = functools.partial(
        _feature_kernel,
        inv_b=1.0 / b,
        keep_threshold=keep_threshold,
        apply_dropout=apply_dropout,
    )

    n_out = b * 4 * size
    bytes_accessed = 4 * (2 * b * size + n_out + (n_out if apply_dropout else 0) + 8 * size)
    cost = pl.CostEstimate(
        flops=10 * n_out, transcendentals=4 * size, bytes_accessed=bytes_accessed)

    out3 = pl.pallas_call(
        kernel,
        out_shape=jax.ShapeDtypeStruct((b, 4, size), jnp.float32),
        grid=grid,
        in_specs=in_specs,
        out_specs=pl.BlockSpec((b, 4, tf), lambda j: (0, 0, j)),
        compiler_params=pltpu.CompilerParams(
            dimension_semantics=("parallel",)),   # feature tiles are independent
        cost_estimate=cost,
    )(*operands)

    # (B, 4, size) -> (B, 4*size) is a contiguous reshape and matches
    # torch.cat([prem, hypo, prem-hypo, prem*hypo], dim=1) exactly.
    return out3.reshape(b, 4 * size)


def _reference(prem, hypo, gamma, beta, bits, p):
    """Pure-JAX reference for correctness checking (same dropout bits)."""
    x = jnp.concatenate([prem, hypo, prem - hypo, prem * hypo], axis=1)
    mean = jnp.mean(x, axis=0, keepdims=True)
    var = jnp.mean((x - mean) ** 2, axis=0, keepdims=True)
    y = (x - mean) / jnp.sqrt(var + EPS) * gamma[None, :] + beta[None, :]
    if p > 0.0:
        threshold = jnp.uint32(min(int(round(p * float(2 ** 32))), 2 ** 32 - 1))
        keep = bits.reshape(x.shape) >= threshold
        y = jnp.where(keep, y / (1.0 - p), 0.0)
    return y


if __name__ == "__main__":
    # Small shapes consistent with the module: Feature(size=32, dropout=0.1).
    batch, size, dropout_p = 8, 32, 0.1

    key = jax.random.PRNGKey(0)
    k_prem, k_hypo, k_drop = jax.random.split(key, 3)
    prem = jax.random.normal(k_prem, (batch, size), dtype=jnp.float32)
    hypo = jax.random.normal(k_hypo, (batch, size), dtype=jnp.float32)

    # nn.BatchNorm1d default init: weight = 1, bias = 0.
    gamma = jnp.ones((4 * size,), dtype=jnp.float32)
    beta = jnp.zeros((4 * size,), dtype=jnp.float32)

    out = feature_forward(prem, hypo, gamma, beta,
                          dropout_p=dropout_p, rng_key=k_drop)
    out = jax.block_until_ready(out)

    assert out.shape == (batch, 4 * size)
    assert bool(jnp.all(jnp.isfinite(out)))

    # Check against a pure-JAX reference using the same dropout bits.
    bits = make_dropout_bits(k_drop, batch, size)
    ref = _reference(prem, hypo, gamma, beta, bits, dropout_p)
    assert bool(jnp.allclose(out, ref, rtol=1e-3, atol=1e-3)), "mismatch vs reference"

    print("KERNEL_OK")
</pallas_src>

<mosaic_0001>
module attributes {stable_mosaic.version = 11 : i64} {
  func.func @_feature_kernel(%arg0: i32, %arg1: memref<8x32xf32, #tpu.memory_space<vmem>>, %arg2: memref<8x32xf32, #tpu.memory_space<vmem>>, %arg3: memref<4x32xf32, #tpu.memory_space<vmem>>, %arg4: memref<4x32xf32, #tpu.memory_space<vmem>>, %arg5: memref<8x4x32xi32, #tpu.memory_space<vmem>>, %arg6: memref<8x4x32xf32, #tpu.memory_space<vmem>>) attributes {dimension_semantics = [#tpu.dimension_semantics<parallel>], iteration_bounds = array<i64: 1>, scalar_prefetch = 0 : i64, scratch_operands = 0 : i64, tpu.core_type = #tpu.core_type<tc>, window_params = [{transform_indices = @transform_0, window_bounds = array<i64: 8, 32>}, {transform_indices = @transform_1, window_bounds = array<i64: 8, 32>}, {transform_indices = @transform_2, window_bounds = array<i64: 4, 32>}, {transform_indices = @transform_3, window_bounds = array<i64: 4, 32>}, {transform_indices = @transform_4, window_bounds = array<i64: 8, 4, 32>}, {transform_indices = @transform_5, window_bounds = array<i64: 8, 4, 32>}]} {
    %c0 = arith.constant 0 : index
    %c0_0 = arith.constant 0 : index
    %0 = vector.load %arg1[%c0, %c0_0] : memref<8x32xf32, #tpu.memory_space<vmem>>, vector<8x32xf32>
    %c0_1 = arith.constant 0 : index
    %c0_2 = arith.constant 0 : index
    %1 = vector.load %arg2[%c0_1, %c0_2] : memref<8x32xf32, #tpu.memory_space<vmem>>, vector<8x32xf32>
    %2 = arith.subf %0, %1 : vector<8x32xf32>
    %3 = arith.mulf %0, %1 : vector<8x32xf32>
    %4 = vector.shape_cast %0 : vector<8x32xf32> to vector<8x1x32xf32>
    %5 = vector.shape_cast %1 : vector<8x32xf32> to vector<8x1x32xf32>
    %6 = vector.shape_cast %2 : vector<8x32xf32> to vector<8x1x32xf32>
    %7 = vector.shape_cast %3 : vector<8x32xf32> to vector<8x1x32xf32>
    %8 = tpu.concatenate %4, %5, %6, %7 in 1 : vector<8x1x32xf32>, vector<8x1x32xf32>, vector<8x1x32xf32>, vector<8x1x32xf32> -> vector<8x4x32xf32>
    %cst = arith.constant dense<0.000000e+00> : vector<4x32xf32>
    %9 = vector.multi_reduction <add>, %8, %cst [0] : vector<8x4x32xf32> to vector<4x32xf32>
    %10 = vector.shape_cast %9 : vector<4x32xf32> to vector<1x4x32xf32>
    %11 = arith.mulf %8, %8 : vector<8x4x32xf32>
    %cst_3 = arith.constant dense<0.000000e+00> : vector<4x32xf32>
    %12 = vector.multi_reduction <add>, %11, %cst_3 [0] : vector<8x4x32xf32> to vector<4x32xf32>
    %13 = vector.shape_cast %12 : vector<4x32xf32> to vector<1x4x32xf32>
    %cst_4 = arith.constant 1.250000e-01 : f32
    %14 = vector.broadcast %cst_4 : f32 to vector<1x4x32xf32>
    %15 = arith.mulf %10, %14 : vector<1x4x32xf32>
    %cst_5 = arith.constant 1.250000e-01 : f32
    %16 = vector.broadcast %cst_5 : f32 to vector<1x4x32xf32>
    %17 = arith.mulf %13, %16 : vector<1x4x32xf32>
    %18 = arith.mulf %15, %15 : vector<1x4x32xf32>
    %19 = arith.subf %17, %18 : vector<1x4x32xf32>
    %20 = vector.broadcast %15 : vector<1x4x32xf32> to vector<8x4x32xf32>
    %21 = arith.subf %8, %20 : vector<8x4x32xf32>
    %cst_6 = arith.constant 9.99999974E-6 : f32
    %22 = vector.broadcast %cst_6 : f32 to vector<1x4x32xf32>
    %23 = arith.addf %19, %22 : vector<1x4x32xf32>
    %24 = math.rsqrt %23 : vector<1x4x32xf32>
    %25 = vector.broadcast %24 : vector<1x4x32xf32> to vector<8x4x32xf32>
    %26 = arith.mulf %21, %25 : vector<8x4x32xf32>
    %c0_7 = arith.constant 0 : index
    %c0_8 = arith.constant 0 : index
    %27 = vector.load %arg3[%c0_7, %c0_8] : memref<4x32xf32, #tpu.memory_space<vmem>>, vector<4x32xf32>
    %28 = vector.shape_cast %27 : vector<4x32xf32> to vector<1x4x32xf32>
    %29 = vector.broadcast %28 : vector<1x4x32xf32> to vector<8x4x32xf32>
    %30 = arith.mulf %26, %29 : vector<8x4x32xf32>
    %c0_9 = arith.constant 0 : index
    %c0_10 = arith.constant 0 : index
    %31 = vector.load %arg4[%c0_9, %c0_10] : memref<4x32xf32, #tpu.memory_space<vmem>>, vector<4x32xf32>
    %32 = vector.shape_cast %31 : vector<4x32xf32> to vector<1x4x32xf32>
    %33 = vector.broadcast %32 : vector<1x4x32xf32> to vector<8x4x32xf32>
    %34 = arith.addf %30, %33 : vector<8x4x32xf32>
    %c0_11 = arith.constant 0 : index
    %c0_12 = arith.constant 0 : index
    %c0_13 = arith.constant 0 : index
    %35 = vector.load %arg5[%c0_11, %c0_12, %c0_13] : memref<8x4x32xi32, #tpu.memory_space<vmem>>, vector<8x4x32xi32>
    %c429496730_i32 = arith.constant 429496730 : i32
    %36 = vector.broadcast %c429496730_i32 : i32 to vector<8x4x32xi32>
    %37 = arith.cmpi uge, %35, %36 : vector<8x4x32xi32>
    %cst_14 = arith.constant 0.000000e+00 : f32
    %38 = vector.broadcast %cst_14 : f32 to vector<8x4x32xf32>
    %39 = arith.select %37, %34, %38 : vector<8x4x32xi1>, vector<8x4x32xf32>
    %c0_15 = arith.constant 0 : index
    %c0_16 = arith.constant 0 : index
    %c0_17 = arith.constant 0 : index
    %40 = vector.load %arg6[%c0_15, %c0_16, %c0_17] : memref<8x4x32xf32, #tpu.memory_space<vmem>>, vector<8x4x32xf32>
    tpu.vector_store %arg6[%c0_15, %c0_16, %c0_17], %39 {strides = array<i32>} : memref<8x4x32xf32, #tpu.memory_space<vmem>>, vector<8x4x32xf32>,
    return
  }
  func.func @transform_0(%arg0: i32) -> (i32, i32) {
    %c0_i32 = arith.constant 0 : i32
    %c0_i32_0 = arith.constant 0 : i32
    return %c0_i32, %arg0 : i32, i32
  }
  func.func @transform_1(%arg0: i32) -> (i32, i32) {
    %c0_i32 = arith.constant 0 : i32
    %c0_i32_0 = arith.constant 0 : i32
    return %c0_i32, %arg0 : i32, i32
  }
  func.func @transform_2(%arg0: i32) -> (i32, i32) {
    %c0_i32 = arith.constant 0 : i32
    %c0_i32_0 = arith.constant 0 : i32
    return %c0_i32, %arg0 : i32, i32
  }
  func.func @transform_3(%arg0: i32) -> (i32, i32) {
    %c0_i32 = arith.constant 0 : i32
    %c0_i32_0 = arith.constant 0 : i32
    return %c0_i32, %arg0 : i32, i32
  }
  func.func @transform_4(%arg0: i32) -> (i32, i32, i32) {
    %c0_i32 = arith.constant 0 : i32
    %c0_i32_0 = arith.constant 0 : i32
    %c0_i32_1 = arith.constant 0 : i32
    return %c0_i32, %c0_i32_0, %arg0 : i32, i32, i32
  }
  func.func @transform_5(%arg0: i32) -> (i32, i32, i32) {
    %c0_i32 = arith.constant 0 : i32
    %c0_i32_0 = arith.constant 0 : i32
    %c0_i32_1 = arith.constant 0 : i32
    return %c0_i32, %c0_i32_0, %arg0 : i32, i32, i32
  }
}

</mosaic_0001>

<llo_original>
// kernel: tpu_custom_call.1
$region0: #{tpu_custom_call.1}
  #allocation0 [shape = 'u32[]', space=smem, size = 0x4, offset = 0x4, fixed_abs, tag = 'smem constant byte address 0x4 - core index']
  #allocation1 [shape = 'u32[144,128]{1,0:T(1,128)}', space=vmem, size = 0x12000, scoped, tag = 'internal scratch']
  %s0 = inlined_call_operand.hbm [shape: f32[8,32], index: 0, kind: input, shape index: {}]
  %s1 = inlined_call_operand.hbm [shape: f32[8,32], index: 1, kind: input, shape index: {}]
  %s2 = inlined_call_operand.vmem [shape: f32[4,32], index: 2, kind: input, shape index: {}]
  %s3 = inlined_call_operand.vmem [shape: f32[4,32], index: 3, kind: input, shape index: {}]
  %s4 = inlined_call_operand.hbm [shape: u32[8,4,32], index: 4, kind: input, shape index: {}]
  %s5 = inlined_call_operand.hbm [shape: f32[8,4,32], index: 5, kind: output, shape index: {}]
  %s6 = sld [smem:[#allocation0]]
  $region42: #{tpu_custom_call.1} parent=0
    _
  %s8 = ssub.s32 1, %s6
  %s9 = scalar_select 0, %s8, %s6
  $region1: #{tpu_custom_call.1} parent=0
    #allocation2 [shape = 'u8[4096]{0}', space=vmem, size = 0x1000, scoped, tag = 'input window, operand 0, single buffered']
    #allocation3 [shape = 's32[1]{0}', space=sflag, size = 0x4, scoped, tag = 'scoped memory for tpu_custom_call.1']
    #allocation4 [shape = 's32[1]{0}', space=sflag, size = 0x4, scoped, tag = 'scoped memory for tpu_custom_call.1']
    #allocation5 [shape = 'u8[4096]{0}', space=vmem, size = 0x1000, scoped, tag = 'input window, operand 1, single buffered']
    #allocation6 [shape = 's32[1]{0}', space=sflag, size = 0x4, scoped, tag = 'scoped memory for tpu_custom_call.1']
    #allocation7 [shape = 'u8[16384]{0}', space=vmem, size = 0x4000, scoped, tag = 'input window, operand 4, single buffered']
    #allocation8 [shape = 'u8[16384]{0}', space=vmem, size = 0x4000, scoped, tag = 'output window, operand 0, single buffered']
    %10 = vsyncpa [#allocation3], 0
    %11 = vsyncpa [#allocation6], 0
    %12 = vsyncpa [#allocation4], 0
    // Predicated region
    $region2: #{tpu_custom_call.1} parent=1 // pred_check
      _
    $region3: #{tpu_custom_call.1} parent=1 // pred_check_branch
      %14 = sbr.rel (0) target = $region5
    $region4: #{tpu_custom_call.1} parent=1 // pred_region
      %s16 = ssub.s32 128, 128
      %17 = vsyncadd [#allocation3], %s16
      %s19 = sshll.u32 [#allocation2], 4
      %s20 = int_to_ptr.vmem [resolvable:$true] %s19
      %22 = dma.hbm_to_vmem [thread:$0]  %s0, 128, %s20, [#allocation3]
    $region5: #{tpu_custom_call.1} parent=1 // pred_fallthru
      _
    // Predicated region
    $region6: #{tpu_custom_call.1} parent=1 // pred_check
      _
    $region7: #{tpu_custom_call.1} parent=1 // pred_check_branch
      %24 = sbr.rel (0) target = $region9
    $region8: #{tpu_custom_call.1} parent=1 // pred_region
      %s26 = ssub.s32 128, 128
      %27 = vsyncadd [#allocation6], %s26
      %s29 = sshll.u32 [#allocation5], 4
      %s30 = int_to_ptr.vmem [resolvable:$true] %s29
      %32 = dma.hbm_to_vmem [thread:$0]  %s1, 128, %s30, [#allocation6]
    $region9: #{tpu_custom_call.1} parent=1 // pred_fallthru
      _
    // Predicated region
    $region10: #{tpu_custom_call.1} parent=1 // pred_check
      _
    $region11: #{tpu_custom_call.1} parent=1 // pred_check_branch
      %34 = sbr.rel (0) target = $region13
    $region12: #{tpu_custom_call.1} parent=1 // pred_region
      _
    $region13: #{tpu_custom_call.1} parent=1 // pred_fallthru
      _
    // Predicated region
    $region14: #{tpu_custom_call.1} parent=1 // pred_check
      _
    $region15: #{tpu_custom_call.1} parent=1 // pred_check_branch
      %36 = sbr.rel (0) target = $region17
    $region16: #{tpu_custom_call.1} parent=1 // pred_region
      _
    $region17: #{tpu_custom_call.1} parent=1 // pred_fallthru
      _
    // Predicated region
    $region18: #{tpu_custom_call.1} parent=1 // pred_check
      _
    $region19: #{tpu_custom_call.1} parent=1 // pred_check_branch
      %38 = sbr.rel (0) target = $region21
    $region20: #{tpu_custom_call.1} parent=1 // pred_region
      %s40 = ssub.s32 512, 512
      %41 = vsyncadd [#allocation6], %s40
      %s42 = sshll.u32 [#allocation7], 4
      %s43 = int_to_ptr.vmem [resolvable:$true] %s42
      %48 = dma.hbm_to_vmem [thread:$0]  %s4, 512, %s43, [#allocation6], 64, 64, 4
    $region21: #{tpu_custom_call.1} parent=1 // pred_fallthru
      _
    // Predicated region
    $region22: #{tpu_custom_call.1} parent=1 // pred_check
      _
    $region23: #{tpu_custom_call.1} parent=1 // pred_check_branch
      %50 = sbr.rel (0) target = $region25
    $region24: #{tpu_custom_call.1} parent=1 // pred_region
      %51 = dma.done [#allocation3], 128
    $region25: #{tpu_custom_call.1} parent=1 // pred_fallthru
      _
    // Predicated region
    $region26: #{tpu_custom_call.1} parent=1 // pred_check
      _
    $region27: #{tpu_custom_call.1} parent=1 // pred_check_branch
      %53 = sbr.rel (0) target = $region29
    $region28: #{tpu_custom_call.1} parent=1 // pred_region
      %54 = dma.done [#allocation6], 128
    $region29: #{tpu_custom_call.1} parent=1 // pred_fallthru
      _
    // Predicated region
    $region30: #{tpu_custom_call.1} parent=1 // pred_check
      _
    $region31: #{tpu_custom_call.1} parent=1 // pred_check_branch
      %56 = sbr.rel (0) target = $region33
    $region32: #{tpu_custom_call.1} parent=1 // pred_region
      %57 = dma.done [#allocation6], 512
    $region33: #{tpu_custom_call.1} parent=1 // pred_fallthru
      _
    %v58 = vld [vmem:[#allocation2] sm:$0xff]
    %v59 = vld [vmem:[#allocation5] sm:$0xff]
    %v60 = vsub.f32 %v58, %v59
    %v61 = vmul.f32 %v58, %v59
    %v63 = vcombine.high %v58, %v58
    %v65 = vunpack.c.l.s4 1966171168
    %v66 = vunpack.c.0.s8 %v65
    %v67 = vlaneseq
    %v68 = vshrl.u32 %v67, 7
    %v69 = vsub.s32 %v66, %v68
    %v70 = vrot.slane %v58, %v69
    %v72 = vunpack.c.l.s4 1966171168
    %v73 = vunpack.c.0.s8 %v72
    %v74 = vlaneseq
    %v75 = vshrl.u32 %v74, 7
    %v76 = vsub.s32 %v73, %v75
    %v77 = vrot.slane %v63, %v76
    %v78 = vcombine.high %v70, %v70
    %v79 = vcombine.high %v77, %v77
    %v81 = vunpack.c.l.s4 1966171168
    %v82 = vunpack.c.0.s8 %v81
    %v83 = vlaneseq
    %v84 = vshrl.u32 %v83, 7
    %v85 = vsub.s32 %v82, %v84
    %v86 = vrot.slane %v70, %v85
    %v88 = vunpack.c.l.s4 1966171168
    %v89 = vunpack.c.0.s8 %v88
    %v90 = vlaneseq
    %v91 = vshrl.u32 %v90, 7
    %v92 = vsub.s32 %v89, %v91
    %v93 = vrot.slane %v77, %v92
    %v95 = vunpack.c.l.s4 1966171168
    %v96 = vunpack.c.0.s8 %v95
    %v97 = vlaneseq
    %v98 = vshrl.u32 %v97, 7
    %v99 = vsub.s32 %v96, %v98
    %v100 = vrot.slane %v78, %v99
    %v102 = vunpack.c.l.s4 1966171168
    %v103 = vunpack.c.0.s8 %v102
    %v104 = vlaneseq
    %v105 = vshrl.u32 %v104, 7
    %v106 = vsub.s32 %v103, %v105
    %v107 = vrot.slane %v79, %v106
    %v108 = vcombine.high %v86, %v86
    %v109 = vcombine.high %v93, %v93
    %v110 = vcombine.high %v100, %v100
    %v111 = vcombine.high %v107, %v107
    %v121 = vcombine.high %v59, %v59
    %v123 = vunpack.c.l.s4 1966171168
    %v124 = vunpack.c.0.s8 %v123
    %v125 = vlaneseq
    %v126 = vshrl.u32 %v125, 7
    %v127 = vsub.s32 %v124, %v126
    %v128 = vrot.slane %v59, %v127
    %v130 = vunpack.c.l.s4 1966171168
    %v131 = vunpack.c.0.s8 %v130
    %v132 = vlaneseq
    %v133 = vshrl.u32 %v132, 7
    %v134 = vsub.s32 %v131, %v133
    %v135 = vrot.slane %v121, %v134
    %v136 = vcombine.high %v128, %v128
    %v137 = vcombine.high %v135, %v135
    %v139 = vunpack.c.l.s4 1966171168
    %v140 = vunpack.c.0.s8 %v139
    %v141 = vlaneseq
    %v142 = vshrl.u32 %v141, 7
    %v143 = vsub.s32 %v140, %v142
    %v144 = vrot.slane %v128, %v143
    %v146 = vunpack.c.l.s4 1966171168
    %v147 = vunpack.c.0.s8 %v146
    %v148 = vlaneseq
    %v149 = vshrl.u32 %v148, 7
    %v150 = vsub.s32 %v147, %v149
    %v151 = vrot.slane %v135, %v150
    %v153 = vunpack.c.l.s4 1966171168
    %v154 = vunpack.c.0.s8 %v153
    %v155 = vlaneseq
    %v156 = vshrl.u32 %v155, 7
    %v157 = vsub.s32 %v154, %v156
    %v158 = vrot.slane %v136, %v157
    %v160 = vunpack.c.l.s4 1966171168
    %v161 = vunpack.c.0.s8 %v160
    %v162 = vlaneseq
    %v163 = vshrl.u32 %v162, 7
    %v164 = vsub.s32 %v161, %v163
    %v165 = vrot.slane %v137, %v164
    %v166 = vcombine.high %v144, %v144
    %v167 = vcombine.high %v151, %v151
    %v168 = vcombine.high %v158, %v158
    %v169 = vcombine.high %v165, %v165
    %v171 = vcombine.high %v60, %v60
    %v173 = vunpack.c.l.s4 1966171168
    %v174 = vunpack.c.0.s8 %v173
    %v175 = vlaneseq
    %v176 = vshrl.u32 %v175, 7
    %v177 = vsub.s32 %v174, %v176
    %v178 = vrot.slane %v60, %v177
    %v180 = vunpack.c.l.s4 1966171168
    %v181 = vunpack.c.0.s8 %v180
    %v182 = vlaneseq
    %v183 = vshrl.u32 %v182, 7
    %v184 = vsub.s32 %v181, %v183
    %v185 = vrot.slane %v171, %v184
    %v186 = vcombine.high %v178, %v178
    %v187 = vcombine.high %v185, %v185
    %v189 = vunpack.c.l.s4 1966171168
    %v190 = vunpack.c.0.s8 %v189
    %v191 = vlaneseq
    %v192 = vshrl.u32 %v191, 7
    %v193 = vsub.s32 %v190, %v192
    %v194 = vrot.slane %v178, %v193
    %v196 = vunpack.c.l.s4 1966171168
    %v197 = vunpack.c.0.s8 %v196
    %v198 = vlaneseq
    %v199 = vshrl.u32 %v198, 7
    %v200 = vsub.s32 %v197, %v199
    %v201 = vrot.slane %v185, %v200
    %v203 = vunpack.c.l.s4 1966171168
    %v204 = vunpack.c.0.s8 %v203
    %v205 = vlaneseq
    %v206 = vshrl.u32 %v205, 7
    %v207 = vsub.s32 %v204, %v206
    %v208 = vrot.slane %v186, %v207
    %v210 = vunpack.c.l.s4 1966171168
    %v211 = vunpack.c.0.s8 %v210
    %v212 = vlaneseq
    %v213 = vshrl.u32 %v212, 7
    %v214 = vsub.s32 %v211, %v213
    %v215 = vrot.slane %v187, %v214
    %v216 = vcombine.high %v194, %v194
    %v217 = vcombine.high %v201, %v201
    %v218 = vcombine.high %v208, %v208
    %v219 = vcombine.high %v215, %v215
    %v221 = vcombine.high %v61, %v61
    %v223 = vunpack.c.l.s4 1966171168
    %v224 = vunpack.c.0.s8 %v223
    %v225 = vlaneseq
    %v226 = vshrl.u32 %v225, 7
    %v227 = vsub.s32 %v224, %v226
    %v228 = vrot.slane %v61, %v227
    %v230 = vunpack.c.l.s4 1966171168
    %v231 = vunpack.c.0.s8 %v230
    %v232 = vlaneseq
    %v233 = vshrl.u32 %v232, 7
    %v234 = vsub.s32 %v231, %v233
    %v235 = vrot.slane %v221, %v234
    %v236 = vcombine.high %v228, %v228
    %v237 = vcombine.high %v235, %v235
    %v239 = vunpack.c.l.s4 1966171168
    %v240 = vunpack.c.0.s8 %v239
    %v241 = vlaneseq
    %v242 = vshrl.u32 %v241, 7
    %v243 = vsub.s32 %v240, %v242
    %v244 = vrot.slane %v228, %v243
    %v246 = vunpack.c.l.s4 1966171168
    %v247 = vunpack.c.0.s8 %v246
    %v248 = vlaneseq
    %v249 = vshrl.u32 %v248, 7
    %v250 = vsub.s32 %v247, %v249
    %v251 = vrot.slane %v235, %v250
    %v253 = vunpack.c.l.s4 1966171168
    %v254 = vunpack.c.0.s8 %v253
    %v255 = vlaneseq
    %v256 = vshrl.u32 %v255, 7
    %v257 = vsub.s32 %v254, %v256
    %v258 = vrot.slane %v236, %v257
    %v260 = vunpack.c.l.s4 1966171168
    %v261 = vunpack.c.0.s8 %v260
    %v262 = vlaneseq
    %v263 = vshrl.u32 %v262, 7
    %v264 = vsub.s32 %v261, %v263
    %v265 = vrot.slane %v237, %v264
    %v266 = vcombine.high %v244, %v244
    %v267 = vcombine.high %v251, %v251
    %v268 = vcombine.high %v258, %v258
    %v269 = vcombine.high %v265, %v265
    %v270 = vlaneseq
    %v271 = vshrl.u32 %v270, 7
    %v272 = vsub.s32 0, %v271
    %v273 = vrot.slane %v144, %v272
    %v274 = vlaneseq
    %v275 = vshrl.u32 %v274, 7
    %v276 = vsub.s32 0, %v275
    %v277 = vrot.slane %v158, %v276
    %v278 = vlaneseq
    %v279 = vshrl.u32 %v278, 7
    %v280 = vsub.s32 0, %v279
    %v281 = vrot.slane %v166, %v280
    %v282 = vlaneseq
    %v283 = vshrl.u32 %v282, 7
    %v284 = vsub.s32 0, %v283
    %v285 = vrot.slane %v168, %v284
    %v286 = vlaneseq
    %v287 = vshrl.u32 %v286, 7
    %v288 = vsub.s32 0, %v287
    %v289 = vrot.slane %v151, %v288
    %v290 = vlaneseq
    %v291 = vshrl.u32 %v290, 7
    %v292 = vsub.s32 0, %v291
    %v293 = vrot.slane %v165, %v292
    %v294 = vlaneseq
    %v295 = vshrl.u32 %v294, 7
    %v296 = vsub.s32 0, %v295
    %v297 = vrot.slane %v167, %v296
    %v298 = vlaneseq
    %v299 = vshrl.u32 %v298, 7
    %v300 = vsub.s32 0, %v299
    %v301 = vrot.slane %v169, %v300
    %v310 = vlaneseq
    %v311 = vshrl.u32 %v310, 7
    %v312 = vsub.s32 0, %v311
    %v313 = vrot.slane %v194, %v312
    %v314 = vlaneseq
    %v315 = vshrl.u32 %v314, 7
    %v316 = vsub.s32 0, %v315
    %v317 = vrot.slane %v208, %v316
    %v318 = vlaneseq
    %v319 = vshrl.u32 %v318, 7
    %v320 = vsub.s32 0, %v319
    %v321 = vrot.slane %v216, %v320
    %v322 = vlaneseq
    %v323 = vshrl.u32 %v322, 7
    %v324 = vsub.s32 0, %v323
    %v325 = vrot.slane %v218, %v324
    %v326 = vlaneseq
    %v327 = vshrl.u32 %v326, 7
    %v328 = vsub.s32 0, %v327
    %v329 = vrot.slane %v201, %v328
    %v330 = vlaneseq
    %v331 = vshrl.u32 %v330, 7
    %v332 = vsub.s32 0, %v331
    %v333 = vrot.slane %v215, %v332
    %v334 = vlaneseq
    %v335 = vshrl.u32 %v334, 7
    %v336 = vsub.s32 0, %v335
    %v337 = vrot.slane %v217, %v336
    %v338 = vlaneseq
    %v339 = vshrl.u32 %v338, 7
    %v340 = vsub.s32 0, %v339
    %v341 = vrot.slane %v219, %v340
    %v350 = vlaneseq
    %v351 = vshrl.u32 %v350, 7
    %v352 = vsub.s32 0, %v351
    %v353 = vrot.slane %v244, %v352
    %v354 = vlaneseq
    %v355 = vshrl.u32 %v354, 7
    %v356 = vsub.s32 0, %v355
    %v357 = vrot.slane %v258, %v356
    %v358 = vlaneseq
    %v359 = vshrl.u32 %v358, 7
    %v360 = vsub.s32 0, %v359
    %v361 = vrot.slane %v266, %v360
    %v362 = vlaneseq
    %v363 = vshrl.u32 %v362, 7
    %v364 = vsub.s32 0, %v363
    %v365 = vrot.slane %v268, %v364
    %v366 = vlaneseq
    %v367 = vshrl.u32 %v366, 7
    %v368 = vsub.s32 0, %v367
    %v369 = vrot.slane %v251, %v368
    %v370 = vlaneseq
    %v371 = vshrl.u32 %v370, 7
    %v372 = vsub.s32 0, %v371
    %v373 = vrot.slane %v265, %v372
    %v374 = vlaneseq
    %v375 = vshrl.u32 %v374, 7
    %v376 = vsub.s32 0, %v375
    %v377 = vrot.slane %v267, %v376
    %v378 = vlaneseq
    %v379 = vshrl.u32 %v378, 7
    %v380 = vsub.s32 0, %v379
    %v381 = vrot.slane %v269, %v380
    %vm390 = vcmask 1040384
    %v391 = vsel %vm390, %v86, %v273
    %v392 = vsel %vm390, %v100, %v277
    %v393 = vsel %vm390, %v108, %v281
    %v394 = vsel %vm390, %v110, %v285
    %v395 = vsel %vm390, %v93, %v289
    %v396 = vsel %vm390, %v107, %v293
    %v397 = vsel %vm390, %v109, %v297
    %v398 = vsel %vm390, %v111, %v301
    %vm399 = vcmask 1041408
    %v400 = vsel %vm399, %v391, %v313
    %v401 = vsel %vm399, %v392, %v317
    %v402 = vsel %vm399, %v393, %v321
    %v403 = vsel %vm399, %v394, %v325
    %v404 = vsel %vm399, %v395, %v329
    %v405 = vsel %vm399, %v396, %v333
    %v406 = vsel %vm399, %v397, %v337
    %v407 = vsel %vm399, %v398, %v341
    %vm408 = vcmask 1042432
    %v409 = vsel %vm408, %v400, %v353
    %v410 = vsel %vm408, %v401, %v357
    %v411 = vsel %vm408, %v402, %v361
    %v412 = vsel %vm408, %v403, %v365
    %v413 = vsel %vm408, %v404, %v369
    %v414 = vsel %vm408, %v405, %v373
    %v415 = vsel %vm408, %v406, %v377
    %v416 = vsel %vm408, %v407, %v381
    %vm417 = vcmask 257024
    %v418 = vsel %vm417, %v409, 0.0
    %v419 = vsel %vm417, %v410, 0.0
    %v420 = vadd.f32 %v418, %v419
    %v421 = vsel %vm417, %v411, 0.0
    %v422 = vadd.f32 %v420, %v421
    %v423 = vsel %vm417, %v412, 0.0
    %v424 = vadd.f32 %v422, %v423
    %v425 = vsel %vm417, %v413, 0.0
    %v426 = vadd.f32 %v424, %v425
    %v427 = vsel %vm417, %v414, 0.0
    %v428 = vadd.f32 %v426, %v427
    %v429 = vsel %vm417, %v415, 0.0
    %v430 = vadd.f32 %v428, %v429
    %v431 = vsel %vm417, %v416, 0.0
    %v432 = vadd.f32 %v430, %v431
    %v433 = vmul.f32 %v409, %v409
    %v434 = vmul.f32 %v410, %v410
    %v435 = vmul.f32 %v411, %v411
    %v436 = vmul.f32 %v412, %v412
    %v437 = vmul.f32 %v413, %v413
    %v438 = vmul.f32 %v414, %v414
    %v439 = vmul.f32 %v415, %v415
    %v440 = vmul.f32 %v416, %v416
    %v441 = vsel %vm417, %v433, 0.0
    %v442 = vsel %vm417, %v434, 0.0
    %v443 = vadd.f32 %v441, %v442
    %v444 = vsel %vm417, %v435, 0.0
    %v445 = vadd.f32 %v443, %v444
    %v446 = vsel %vm417, %v436, 0.0
    %v447 = vadd.f32 %v445, %v446
    %v448 = vsel %vm417, %v437, 0.0
    %v449 = vadd.f32 %v447, %v448
    %v450 = vsel %vm417, %v438, 0.0
    %v451 = vadd.f32 %v449, %v450
    %v452 = vsel %vm417, %v439, 0.0
    %v453 = vadd.f32 %v451, %v452
    %v454 = vsel %vm417, %v440, 0.0
    %v455 = vadd.f32 %v453, %v454
    %v456 = vmul.f32 %v432, 0.125
    %v457 = vmul.f32 %v455, 0.125
    %v458 = vmul.f32 %v456, %v456
    %v459 = vsub.f32 %v457, %v458
    %v460 = vsub.f32 %v409, %v456
    %v461 = vsub.f32 %v410, %v456
    %v462 = vsub.f32 %v411, %v456
    %v463 = vsub.f32 %v412, %v456
    %v464 = vsub.f32 %v413, %v456
    %v465 = vsub.f32 %v414, %v456
    %v466 = vsub.f32 %v415, %v456
    %v467 = vsub.f32 %v416, %v456
    %v468 = vadd.f32 %v459, 1e-05
    %v469 = vrsqrt.pop %v468
    %v470 = vmul.f32 %v460, %v469
    %v471 = vmul.f32 %v461, %v469
    %v472 = vmul.f32 %v462, %v469
    %v473 = vmul.f32 %v463, %v469
    %v474 = vmul.f32 %v464, %v469
    %v475 = vmul.f32 %v465, %v469
    %v476 = vmul.f32 %v466, %v469
    %v477 = vmul.f32 %v467, %v469
    %v478 = vld [vmem:[%s2] sm:$0xf]
    %v479 = vmul.f32 %v470, %v478
    %v480 = vmul.f32 %v471, %v478
    %v481 = vmul.f32 %v472, %v478
    %v482 = vmul.f32 %v473, %v478
    %v483 = vmul.f32 %v474, %v478
    %v484 = vmul.f32 %v475, %v478
    %v485 = vmul.f32 %v476, %v478
    %v486 = vmul.f32 %v477, %v478
    %v487 = vld [vmem:[%s3] sm:$0xf]
    %v488 = vadd.f32 %v479, %v487
    %v489 = vadd.f32 %v480, %v487
    %v490 = vadd.f32 %v481, %v487
    %v491 = vadd.f32 %v482, %v487
    %v492 = vadd.f32 %v483, %v487
    %v493 = vadd.f32 %v484, %v487
    %v494 = vadd.f32 %v485, %v487
    %v495 = vadd.f32 %v486, %v487
    %v496 = vld [vmem:[#allocation7] sm:$0xf]
    %v497 = vld [vmem:[#allocation7 + $0x4] sm:$0xf]
    %v498 = vld [vmem:[#allocation7 + $0x8] sm:$0xf]
    %v499 = vld [vmem:[#allocation7 + $0xc] sm:$0xf]
    %v500 = vld [vmem:[#allocation7 + $0x10] sm:$0xf]
    %v501 = vld [vmem:[#allocation7 + $0x14] sm:$0xf]
    %v502 = vld [vmem:[#allocation7 + $0x18] sm:$0xf]
    %v503 = vld [vmem:[#allocation7 + $0x1c] sm:$0xf]
    %vm504 = vcmp.ge.u32.totalorder %v496, 429496730
    %vm505 = vcmp.ge.u32.totalorder %v497, 429496730
    %vm506 = vcmp.ge.u32.totalorder %v498, 429496730
    %vm507 = vcmp.ge.u32.totalorder %v499, 429496730
    %vm508 = vcmp.ge.u32.totalorder %v500, 429496730
    %vm509 = vcmp.ge.u32.totalorder %v501, 429496730
    %vm510 = vcmp.ge.u32.totalorder %v502, 429496730
    %vm511 = vcmp.ge.u32.totalorder %v503, 429496730
    %v512 = vsel %vm504, %v488, 0.0
    %v513 = vsel %vm505, %v489, 0.0
    %v514 = vsel %vm506, %v490, 0.0
    %v515 = vsel %vm507, %v491, 0.0
    %v516 = vsel %vm508, %v492, 0.0
    %v517 = vsel %vm509, %v493, 0.0
    %v518 = vsel %vm510, %v494, 0.0
    %v519 = vsel %vm511, %v495, 0.0
    %520 = vst.msk [vmem:[#allocation8] sm:$0xf] %vm417, %v512
    %521 = vst.msk [vmem:[#allocation8 + $0x4] sm:$0xf] %vm417, %v513
    %522 = vst.msk [vmem:[#allocation8 + $0x8] sm:$0xf] %vm417, %v514
    %523 = vst.msk [vmem:[#allocation8 + $0xc] sm:$0xf] %vm417, %v515
    %524 = vst.msk [vmem:[#allocation8 + $0x10] sm:$0xf] %vm417, %v516
    %525 = vst.msk [vmem:[#allocation8 + $0x14] sm:$0xf] %vm417, %v517
    %526 = vst.msk [vmem:[#allocation8 + $0x18] sm:$0xf] %vm417, %v518
    %527 = vst.msk [vmem:[#allocation8 + $0x1c] sm:$0xf] %vm417, %v519
    // Predicated region
    $region34: #{tpu_custom_call.1} parent=1 // pred_check
      _
    $region35: #{tpu_custom_call.1} parent=1 // pred_check_branch
      %529 = sbr.rel (0) target = $region37
    $region36: #{tpu_custom_call.1} parent=1 // pred_region
      %s531 = ssub.s32 512, 512
      %532 = vsyncadd [#allocation4], %s531
      %s533 = sshll.u32 [#allocation8], 4
      %s534 = int_to_ptr.vmem [resolvable:$true] %s533
      %539 = dma.vmem_to_hbm [thread:$0]  %s534, 512, %s5, [#allocation4], 64, 64, 4
    $region37: #{tpu_custom_call.1} parent=1 // pred_fallthru
      _
    // Predicated region
    $region38: #{tpu_custom_call.1} parent=1 // pred_check
      _
    $region39: #{tpu_custom_call.1} parent=1 // pred_check_branch
      %541 = sbr.rel (0) target = $region41
    $region40: #{tpu_custom_call.1} parent=1 // pred_region
      %542 = dma.done [#allocation4], 512
    $region41: #{tpu_custom_call.1} parent=1 // pred_fallthru
      _
    %543 = vsyncpa [#allocation3], 1
    %544 = vsyncpa [#allocation6], 1
    %545 = vsyncpa [#allocation4], 1

</llo_original>
